<compile_context>
chip_gen: v7x
topology: tpu7x:2x2x1
jax: 0.10.0
libtpu: 0.0.40
codegen_flags: <defaults>
</compile_context>

<pallas_src>
import jax
import jax.numpy as jnp
from jax.experimental import pallas as pl
from jax.experimental.pallas import tpu as pltpu

_BN_EPS = 1e-5
_LANE = 128


def _elu(v):
    # Exact ELU(alpha=1).  Clamping before exp keeps the inactive branch from
    # overflowing to inf for large positive v (and for garbage rows in the
    # ragged last batch block).
    return jnp.where(v > 0, v, jnp.exp(jnp.minimum(v, 0.0)) - 1.0)


def _round_up(n, m):
    return ((n + m - 1) // m) * m


def _fold_bn(w, b, g, be, m, v):
    """Fold inference BatchNorm1d into conv weight/bias.

    w: (K, Cin, Cout); b/g/be/m/v: (1, Cout)."""
    scale = g * jax.lax.rsqrt(v + _BN_EPS)              # (1, Cout)
    return w * scale, (b - m) * scale + be


def prepare_params(params, L, compute_dtype=jnp.bfloat16):
    """Fold BN, pad C1 -> 128 lanes, flatten both convs into single matmuls.

    Layout so the kernel is 3 matmuls + 1 VPU reduction, no in-kernel slicing:
      x_flat (B, Cin*L) @ w1_big (Cin*L, Lout1*C1P) -> h1   (block-Toeplitz conv1)
      h1              @ w2_big (Lout1*C1P, C2)      -> h2   (conv2, Lout2 == 1)
      h2              @ wd1    (C2, H)              -> hid
      sum(hid * wd2_row, -1) + bd2                  -> out

    Call once per model (e.g. via make_forward); the result is static.
    """
    f32 = jnp.float32
    w1 = params['w1'].astype(f32)        # (K1, Cin, C1)
    w2 = params['w2'].astype(f32)        # (K2, C1, C2)
    K1, Cin, C1 = w1.shape
    K2, _, C2 = w2.shape
    Lout1 = L - K1 + 1
    assert Lout1 - K2 + 1 == 1, (
        f"seq_len must be rf+1={K1 + K2 - 1} for the Linear head, got {L}")
    C1P = _round_up(C1, _LANE)

    w1f, b1f = _fold_bn(w1, params['b1'].astype(f32), params['g1'].astype(f32),
                        params['be1'].astype(f32), params['m1'].astype(f32),
                        params['v1'].astype(f32))
    w2f, b2f = _fold_bn(w2, params['b2'].astype(f32), params['g2'].astype(f32),
                        params['be2'].astype(f32), params['m2'].astype(f32),
                        params['v2'].astype(f32))

    # conv1 as one block-Toeplitz matmul on the NCW-flattened input:
    #   row index = cin * L + l,  col index = l1 * C1P + c1,
    #   W1big[cin*L+l, l1*C1P+c1] = w1f[l-l1, cin, c1] for 0 <= l-l1 < K1.
    w1_4d = jnp.zeros((Cin, L, Lout1, C1P), f32)
    for l1 in range(Lout1):
        for k in range(K1):
            w1_4d = w1_4d.at[:, l1 + k, l1, :C1].set(w1f[k])
    w1_big = w1_4d.reshape(Cin * L, Lout1 * C1P)
    b1_big = jnp.tile(jnp.pad(b1f, ((0, 0), (0, C1P - C1))), (1, Lout1))

    # conv2 (output length 1): tap k2 pairs with h1 position l1 == k2.
    # Padded C1 rows are zero (and padded h1 lanes are elu(0) = 0 anyway).
    w2_big = jnp.pad(w2f, ((0, 0), (0, C1P - C1), (0, 0))).reshape(Lout1 * C1P, C2)

    wd1 = params['wd1'].astype(f32)                      # (C2, H)
    bd1 = params['bd1'].astype(f32)                      # (1, H)
    wd2_row = params['wd2'].astype(f32).reshape(1, -1)   # (1, H)
    bd2 = params['bd2'].astype(f32)                      # (1, 1)

    return (w1_big.astype(compute_dtype), b1_big,
            w2_big.astype(compute_dtype), b2f,
            wd1.astype(compute_dtype), bd1, wd2_row, bd2)


def _cnn_head_kernel(x_ref, w1_ref, b1_ref, w2_ref, b2_ref,
                     wd1_ref, bd1_ref, wd2_ref, bd2_ref, out_ref):
    # In-kernel f32 -> bf16 cast (VPU pack, hidden under the MXU); saves the
    # wrapper-side astype HBM pass.
    x = x_ref[...].astype(w1_ref.dtype)
    # conv1 + folded BN1 + ELU : single MXU matmul, lane-dense 384-wide output.
    h1 = _elu(jnp.dot(x, w1_ref[...],
                      preferred_element_type=jnp.float32) + b1_ref[...])
    # conv2 + folded BN2 + ELU (spatial length 1): single matmul.
    h2 = _elu(jnp.dot(h1.astype(w2_ref.dtype), w2_ref[...],
                      preferred_element_type=jnp.float32) + b2_ref[...])
    # dense1 + ELU.  (Dropout layers are identities in eval mode.)
    hid = _elu(jnp.dot(h2.astype(wd1_ref.dtype), wd1_ref[...],
                       preferred_element_type=jnp.float32) + bd1_ref[...])
    # dense2 (H -> 1) as a VPU multiply + lane reduction (no N=1 MXU pass).
    out = jnp.sum(hid * wd2_ref[...], axis=-1, keepdims=True) + bd2_ref[...]
    out_ref[...] = out.astype(out_ref.dtype)


def _select_tiling():
    """Generation-aware batch-tile cap, VMEM limit and multi-core hint.

    v5e/v6e: 128 MiB physical VMEM, single TensorCore -> big tiles, raised limit.
    v7x (and unknown chips): conservative 48 MiB limit (64 MiB/TC on v7x) and a
    preference for an even tile count so the "parallel" batch axis splits
    evenly across the 2 TensorCores.
    """
    kind = ""
    try:
        kind = jax.devices()[0].device_kind.lower()
    except Exception:
        pass
    single_core = any(t in kind for t in
                      ("v5e", "v5 lite", "v5lite", "v6e", "v6 lite", "v6lite"))
    if single_core:
        return 8192, 96 * 1024 * 1024, False
    return 4096, 48 * 1024 * 1024, True


def _forward_prepared(x_ncw, prepared):
    """x_ncw: (B, Cin, L) as in PyTorch NCW; prepared: output of prepare_params.

    Returns (B, 1) float32."""
    (w1_big, b1_big, w2_big, b2_big, wd1, bd1, wd2_row, bd2) = prepared
    B, Cin, L = x_ncw.shape
    Kin = w1_big.shape[0]
    assert Cin * L == Kin, f"input (Cin*L={Cin * L}) does not match weights ({Kin})"
    N1 = w1_big.shape[1]
    C2 = w2_big.shape[1]
    H = wd1.shape[1]

    # NCW -> (B, Cin*L) is a contiguous view: no extra HBM transpose pass.
    # Keep f32 here; the bf16 cast happens inside the kernel.
    x_flat = x_ncw.reshape(B, Kin)

    # Batch tiling: biggest tile that fits the per-generation VMEM budget,
    # ragged last block handled by grid=cdiv (no batch padding pass).
    tb_cap, vmem_limit, multi_core = _select_tiling()
    num_tiles = pl.cdiv(B, tb_cap)
    if multi_core:
        if num_tiles == 1 and B >= 1024:
            num_tiles = 2                      # keep both v7x TCs busy
        elif num_tiles > 1 and num_tiles % 2 == 1:
            num_tiles += 1                     # balanced split across 2 TCs
    TB = _round_up(pl.cdiv(B, num_tiles), 8)   # sublane multiple
    num_tiles = pl.cdiv(B, TB)

    weight_args = (w1_big, b1_big, w2_big, b2_big, wd1, bd1, wd2_row, bd2)
    bytes_accessed = (int(x_flat.size) * x_flat.dtype.itemsize + B * 4 +
                      sum(int(a.size) * a.dtype.itemsize for a in weight_args))
    cost = pl.CostEstimate(
        flops=int(2 * B * (Kin * N1 + N1 * C2 + C2 * H + H)),
        transcendentals=int(B * (N1 + C2 + H)),
        bytes_accessed=int(bytes_accessed))

    def _resident(arr):  # whole array, VMEM-resident across all grid steps
        return pl.BlockSpec(arr.shape, lambda i: (0,) * arr.ndim)

    out = pl.pallas_call(
        _cnn_head_kernel,
        out_shape=jax.ShapeDtypeStruct((B, 1), jnp.float32),
        grid=(num_tiles,),
        in_specs=[pl.BlockSpec((TB, Kin), lambda i: (i, 0))] +
                 [_resident(a) for a in weight_args],
        out_specs=pl.BlockSpec((TB, 1), lambda i: (i, 0)),
        compiler_params=pltpu.CompilerParams(
            dimension_semantics=("parallel",),      # megacore sharding on v7x
            vmem_limit_bytes=vmem_limit),
        cost_estimate=cost,
    )(x_flat, *weight_args)
    return out


def make_forward(params, seq_len):
    """Fold/layout the weights ONCE and return a jitted forward(x_ncw)->(B,1)."""
    prepared = prepare_params(params, seq_len)      # concrete device arrays
    fwd = jax.jit(_forward_prepared)
    return lambda x_ncw: fwd(x_ncw, prepared)


def cnn_1d_underfit_forward(x_ncw, params):
    """Convenience one-shot API (prefer make_forward to cache prepared weights)."""
    return _forward_prepared(x_ncw, prepare_params(params, x_ncw.shape[-1]))


def reference_forward(x_ncw, params):
    """Pure-JAX f32 reference implementing the original module math."""
    x = jnp.transpose(x_ncw, (0, 2, 1)).astype(jnp.float32)   # (B, L, Cin)

    def block(h, w, b, g, be, m, v):
        K = w.shape[0]
        Lout = h.shape[1] - K + 1
        y = sum(jnp.einsum('blc,cd->bld', h[:, k:k + Lout, :], w[k])
                for k in range(K)) + b
        y = (y - m) * jax.lax.rsqrt(v + _BN_EPS) * g + be      # BN (inference)
        return _elu(y)                                         # Dropout/MaxPool(1) = id

    h1 = block(x, params['w1'], params['b1'], params['g1'], params['be1'],
               params['m1'], params['v1'])
    h2 = block(h1, params['w2'], params['b2'], params['g2'], params['be2'],
               params['m2'], params['v2'])
    feat = h2.reshape(h2.shape[0], -1)                         # conv length 1 -> (B, 32)
    hid = _elu(feat @ params['wd1'] + params['bd1'])
    return hid @ params['wd2'] + params['bd2']


def init_params(key):
    Cin, C1, C2, H, O, K = 5, 100, 32, 32, 1, 3
    ks = jax.random.split(key, 20)
    n = lambda i, shape, s=0.1: (s * jax.random.normal(ks[i], shape)).astype(jnp.float32)
    params = {
        # conv1: torch weight (C1, Cin, K) stored as (K, Cin, C1)
        'w1': n(0, (K, Cin, C1)), 'b1': n(1, (1, C1)),
        'g1': (1.0 + n(2, (1, C1))), 'be1': n(3, (1, C1)),
        'm1': n(4, (1, C1)), 'v1': (1.0 + jnp.abs(n(5, (1, C1)))),
        # conv2: torch weight (C2, C1, K) stored as (K, C1, C2)
        'w2': n(6, (K, C1, C2)), 'b2': n(7, (1, C2)),
        'g2': (1.0 + n(8, (1, C2))), 'be2': n(9, (1, C2)),
        'm2': n(10, (1, C2)), 'v2': (1.0 + jnp.abs(n(11, (1, C2)))),
        # dense: torch weights (out, in) stored transposed as (in, out)
        'wd1': n(12, (C2, H)), 'bd1': n(13, (1, H)),
        'wd2': n(14, (H, O)), 'bd2': n(15, (1, O)),
    }
    return {k: v.astype(jnp.float32) for k, v in params.items()}


if __name__ == "__main__":
    key = jax.random.PRNGKey(0)
    pkey, xkey, xkey2 = jax.random.split(key, 3)
    params = init_params(pkey)

    # bf16 inputs/weights inside the kernel -> tolerance reflects bf16 quantization.
    TOL = dict(atol=3e-2, rtol=3e-2)

    # Small demo: seq_len = rf + 1 = 5 so the Linear(32, 32) head is valid.
    B, Cin, L = 2, 5, 5
    forward = make_forward(params, L)      # weights folded/prepared exactly once

    x = jax.random.normal(xkey, (B, Cin, L), dtype=jnp.float32)   # PyTorch NCW
    out = jax.block_until_ready(forward(x))
    ref = jax.block_until_ready(reference_forward(x, params))
    assert out.shape == (B, 1), out.shape
    assert jnp.allclose(out, ref, **TOL), (out, ref)

    # Larger batch: exercises the ragged-last-block path and, on v7x, the
    # even split of the "parallel" batch grid across both TensorCores.
    B2 = 1030
    x2 = jax.random.normal(xkey2, (B2, Cin, L), dtype=jnp.float32)
    out2 = jax.block_until_ready(forward(x2))
    ref2 = jax.block_until_ready(reference_forward(x2, params))
    assert out2.shape == (B2, 1), out2.shape
    assert jnp.allclose(out2, ref2, **TOL)

    print("KERNEL_OK")
</pallas_src>

<mosaic_0001>
module attributes {stable_mosaic.version = 11 : i64} {
  func.func @_cnn_head_kernel(%arg0: i32, %arg1: memref<8x25xf32, #tpu.memory_space<vmem>>, %arg2: memref<25x384xbf16, #tpu.memory_space<vmem>>, %arg3: memref<1x384xf32, #tpu.memory_space<vmem>>, %arg4: memref<384x32xbf16, #tpu.memory_space<vmem>>, %arg5: memref<1x32xf32, #tpu.memory_space<vmem>>, %arg6: memref<32x32xbf16, #tpu.memory_space<vmem>>, %arg7: memref<1x32xf32, #tpu.memory_space<vmem>>, %arg8: memref<1x32xf32, #tpu.memory_space<vmem>>, %arg9: memref<1x1xf32, #tpu.memory_space<vmem>>, %arg10: memref<8x1xf32, #tpu.memory_space<vmem>>) attributes {dimension_semantics = [#tpu.dimension_semantics<parallel>], iteration_bounds = array<i64: 1>, scalar_prefetch = 0 : i64, scratch_operands = 0 : i64, tpu.core_type = #tpu.core_type<tc>, window_params = [{transform_indices = @transform_0, window_bounds = array<i64: 8, 25>}, {pipeline_mode = #tpu.pipeline_mode<synchronous>, transform_indices = @transform_1, window_bounds = array<i64: 25, 384>}, {pipeline_mode = #tpu.pipeline_mode<synchronous>, transform_indices = @transform_2, window_bounds = array<i64: 1, 384>}, {pipeline_mode = #tpu.pipeline_mode<synchronous>, transform_indices = @transform_3, window_bounds = array<i64: 384, 32>}, {pipeline_mode = #tpu.pipeline_mode<synchronous>, transform_indices = @transform_4, window_bounds = array<i64: 1, 32>}, {pipeline_mode = #tpu.pipeline_mode<synchronous>, transform_indices = @transform_5, window_bounds = array<i64: 32, 32>}, {pipeline_mode = #tpu.pipeline_mode<synchronous>, transform_indices = @transform_6, window_bounds = array<i64: 1, 32>}, {pipeline_mode = #tpu.pipeline_mode<synchronous>, transform_indices = @transform_7, window_bounds = array<i64: 1, 32>}, {pipeline_mode = #tpu.pipeline_mode<synchronous>, transform_indices = @transform_8, window_bounds = array<i64: 1, 1>}, {transform_indices = @transform_9, window_bounds = array<i64: 8, 1>}]} {
    %c0 = arith.constant 0 : index
    %c0_0 = arith.constant 0 : index
    %0 = vector.load %arg1[%c0, %c0_0] : memref<8x25xf32, #tpu.memory_space<vmem>>, vector<8x25xf32>
    %1 = arith.truncf %0 : vector<8x25xf32> to vector<8x25xbf16>
    %c0_1 = arith.constant 0 : index
    %c0_2 = arith.constant 0 : index
    %2 = vector.load %arg2[%c0_1, %c0_2] : memref<25x384xbf16, #tpu.memory_space<vmem>>, vector<25x384xbf16>
    %cst = arith.constant dense<0.000000e+00> : vector<8x384xf32>
    %3 = tpu.matmul %1, %2, %cst {dimension_numbers = #tpu.dot_dimension_numbers<[1], [0], [0], [1], [0, 0, 1, 1], [], []>} : vector<8x25xbf16>, vector<25x384xbf16>, vector<8x384xf32> -> vector<8x384xf32>
    %c0_3 = arith.constant 0 : index
    %c0_4 = arith.constant 0 : index
    %4 = vector.load %arg3[%c0_3, %c0_4] : memref<1x384xf32, #tpu.memory_space<vmem>>, vector<1x384xf32>
    %5 = vector.broadcast %4 : vector<1x384xf32> to vector<8x384xf32>
    %6 = arith.addf %3, %5 : vector<8x384xf32>
    %cst_5 = arith.constant 0.000000e+00 : f32
    %7 = vector.broadcast %cst_5 : f32 to vector<8x384xf32>
    %8 = arith.cmpf ogt, %6, %7 : vector<8x384xf32>
    %cst_6 = arith.constant 0.000000e+00 : f32
    %9 = vector.broadcast %cst_6 : f32 to vector<8x384xf32>
    %10 = arith.minimumf %6, %9 : vector<8x384xf32>
    %11 = math.exp %10 : vector<8x384xf32>
    %cst_7 = arith.constant 1.000000e+00 : f32
    %12 = vector.broadcast %cst_7 : f32 to vector<8x384xf32>
    %13 = arith.subf %11, %12 : vector<8x384xf32>
    %14 = arith.select %8, %6, %13 : vector<8x384xi1>, vector<8x384xf32>
    %15 = arith.truncf %14 : vector<8x384xf32> to vector<8x384xbf16>
    %c0_8 = arith.constant 0 : index
    %c0_9 = arith.constant 0 : index
    %16 = vector.load %arg4[%c0_8, %c0_9] : memref<384x32xbf16, #tpu.memory_space<vmem>>, vector<384x32xbf16>
    %cst_10 = arith.constant dense<0.000000e+00> : vector<8x32xf32>
    %17 = tpu.matmul %15, %16, %cst_10 {dimension_numbers = #tpu.dot_dimension_numbers<[1], [0], [0], [1], [0, 0, 1, 1], [], []>} : vector<8x384xbf16>, vector<384x32xbf16>, vector<8x32xf32> -> vector<8x32xf32>
    %c0_11 = arith.constant 0 : index
    %c0_12 = arith.constant 0 : index
    %18 = vector.load %arg5[%c0_11, %c0_12] : memref<1x32xf32, #tpu.memory_space<vmem>>, vector<1x32xf32>
    %19 = vector.broadcast %18 : vector<1x32xf32> to vector<8x32xf32>
    %20 = arith.addf %17, %19 : vector<8x32xf32>
    %cst_13 = arith.constant 0.000000e+00 : f32
    %21 = vector.broadcast %cst_13 : f32 to vector<8x32xf32>
    %22 = arith.cmpf ogt, %20, %21 : vector<8x32xf32>
    %cst_14 = arith.constant 0.000000e+00 : f32
    %23 = vector.broadcast %cst_14 : f32 to vector<8x32xf32>
    %24 = arith.minimumf %20, %23 : vector<8x32xf32>
    %25 = math.exp %24 : vector<8x32xf32>
    %cst_15 = arith.constant 1.000000e+00 : f32
    %26 = vector.broadcast %cst_15 : f32 to vector<8x32xf32>
    %27 = arith.subf %25, %26 : vector<8x32xf32>
    %28 = arith.select %22, %20, %27 : vector<8x32xi1>, vector<8x32xf32>
    %29 = arith.truncf %28 : vector<8x32xf32> to vector<8x32xbf16>
    %c0_16 = arith.constant 0 : index
    %c0_17 = arith.constant 0 : index
    %30 = vector.load %arg6[%c0_16, %c0_17] : memref<32x32xbf16, #tpu.memory_space<vmem>>, vector<32x32xbf16>
    %cst_18 = arith.constant dense<0.000000e+00> : vector<8x32xf32>
    %31 = tpu.matmul %29, %30, %cst_18 {dimension_numbers = #tpu.dot_dimension_numbers<[1], [0], [0], [1], [0, 0, 1, 1], [], []>} : vector<8x32xbf16>, vector<32x32xbf16>, vector<8x32xf32> -> vector<8x32xf32>
    %c0_19 = arith.constant 0 : index
    %c0_20 = arith.constant 0 : index
    %32 = vector.load %arg7[%c0_19, %c0_20] : memref<1x32xf32, #tpu.memory_space<vmem>>, vector<1x32xf32>
    %33 = vector.broadcast %32 : vector<1x32xf32> to vector<8x32xf32>
    %34 = arith.addf %31, %33 : vector<8x32xf32>
    %cst_21 = arith.constant 0.000000e+00 : f32
    %35 = vector.broadcast %cst_21 : f32 to vector<8x32xf32>
    %36 = arith.cmpf ogt, %34, %35 : vector<8x32xf32>
    %cst_22 = arith.constant 0.000000e+00 : f32
    %37 = vector.broadcast %cst_22 : f32 to vector<8x32xf32>
    %38 = arith.minimumf %34, %37 : vector<8x32xf32>
    %39 = math.exp %38 : vector<8x32xf32>
    %cst_23 = arith.constant 1.000000e+00 : f32
    %40 = vector.broadcast %cst_23 : f32 to vector<8x32xf32>
    %41 = arith.subf %39, %40 : vector<8x32xf32>
    %42 = arith.select %36, %34, %41 : vector<8x32xi1>, vector<8x32xf32>
    %c0_24 = arith.constant 0 : index
    %c0_25 = arith.constant 0 : index
    %43 = vector.load %arg8[%c0_24, %c0_25] : memref<1x32xf32, #tpu.memory_space<vmem>>, vector<1x32xf32>
    %44 = vector.broadcast %43 : vector<1x32xf32> to vector<8x32xf32>
    %45 = arith.mulf %42, %44 : vector<8x32xf32>
    %cst_26 = arith.constant dense<0.000000e+00> : vector<8xf32>
    %46 = vector.multi_reduction <add>, %45, %cst_26 [1] : vector<8x32xf32> to vector<8xf32>
    %47 = vector.shape_cast %46 : vector<8xf32> to vector<8x1xf32>
    %c0_27 = arith.constant 0 : index
    %c0_28 = arith.constant 0 : index
    %48 = vector.load %arg9[%c0_27, %c0_28] : memref<1x1xf32, #tpu.memory_space<vmem>>, vector<1x1xf32>
    %49 = vector.broadcast %48 : vector<1x1xf32> to vector<8x1xf32>
    %50 = arith.addf %47, %49 : vector<8x1xf32>
    %c0_29 = arith.constant 0 : index
    %c0_30 = arith.constant 0 : index
    %51 = vector.load %arg10[%c0_29, %c0_30] : memref<8x1xf32, #tpu.memory_space<vmem>>, vector<8x1xf32>
    tpu.vector_store %arg10[%c0_29, %c0_30], %50 {strides = array<i32>} : memref<8x1xf32, #tpu.memory_space<vmem>>, vector<8x1xf32>,
    return
  }
  func.func @transform_0(%arg0: i32) -> (i32, i32) {
    %c0_i32 = arith.constant 0 : i32
    %c0_i32_0 = arith.constant 0 : i32
    return %arg0, %c0_i32 : i32, i32
  }
  func.func @transform_1(%arg0: i32) -> (i32, i32) {
    %c0_i32 = arith.constant 0 : i32
    %c0_i32_0 = arith.constant 0 : i32
    %c0_i32_1 = arith.constant 0 : i32
    return %c0_i32, %c0_i32_0 : i32, i32
  }
  func.func @transform_2(%arg0: i32) -> (i32, i32) {
    %c0_i32 = arith.constant 0 : i32
    %c0_i32_0 = arith.constant 0 : i32
    %c0_i32_1 = arith.constant 0 : i32
    return %c0_i32, %c0_i32_0 : i32, i32
  }
  func.func @transform_3(%arg0: i32) -> (i32, i32) {
    %c0_i32 = arith.constant 0 : i32
    %c0_i32_0 = arith.constant 0 : i32
    %c0_i32_1 = arith.constant 0 : i32
    return %c0_i32, %c0_i32_0 : i32, i32
  }
  func.func @transform_4(%arg0: i32) -> (i32, i32) {
    %c0_i32 = arith.constant 0 : i32
    %c0_i32_0 = arith.constant 0 : i32
    %c0_i32_1 = arith.constant 0 : i32
    return %c0_i32, %c0_i32_0 : i32, i32
  }
  func.func @transform_5(%arg0: i32) -> (i32, i32) {
    %c0_i32 = arith.constant 0 : i32
    %c0_i32_0 = arith.constant 0 : i32
    %c0_i32_1 = arith.constant 0 : i32
    return %c0_i32, %c0_i32_0 : i32, i32
  }
  func.func @transform_6(%arg0: i32) -> (i32, i32) {
    %c0_i32 = arith.constant 0 : i32
    %c0_i32_0 = arith.constant 0 : i32
    %c0_i32_1 = arith.constant 0 : i32
    return %c0_i32, %c0_i32_0 : i32, i32
  }
  func.func @transform_7(%arg0: i32) -> (i32, i32) {
    %c0_i32 = arith.constant 0 : i32
    %c0_i32_0 = arith.constant 0 : i32
    %c0_i32_1 = arith.constant 0 : i32
    return %c0_i32, %c0_i32_0 : i32, i32
  }
  func.func @transform_8(%arg0: i32) -> (i32, i32) {
    %c0_i32 = arith.constant 0 : i32
    %c0_i32_0 = arith.constant 0 : i32
    %c0_i32_1 = arith.constant 0 : i32
    return %c0_i32, %c0_i32_0 : i32, i32
  }
  func.func @transform_9(%arg0: i32) -> (i32, i32) {
    %c0_i32 = arith.constant 0 : i32
    %c0_i32_0 = arith.constant 0 : i32
    return %arg0, %c0_i32 : i32, i32
  }
}

</mosaic_0001>

<llo_original>
// kernel: _forward_prepared.1
$region0: #{_forward_prepared.1}
  #allocation0 [shape = 'u32[]', space=smem, size = 0x4, offset = 0x4, fixed_abs, tag = 'smem constant byte address 0x4 - core index']
  #allocation1 [shape = 'u32[144,128]{1,0:T(1,128)}', space=vmem, size = 0x12000, scoped, tag = 'internal scratch']
  #allocation2 [shape = 'f32[1,1]{1,0:T(1,128)S(1)}', space=vmem, size = 0x200, scoped, tag = 'scoped memory for _forward_prepared.1']
  %s0 = inlined_call_operand.vmem [shape: f32[2,25], index: 0, kind: input, shape index: {}]
  %s1 = inlined_call_operand.vmem [shape: bf16[25,384], index: 1, kind: input, shape index: {}]
  %s2 = inlined_call_operand.vmem [shape: f32[1,384], index: 2, kind: input, shape index: {}]
  %s3 = inlined_call_operand.vmem [shape: bf16[384,32], index: 3, kind: input, shape index: {}]
  %s4 = inlined_call_operand.vmem [shape: f32[1,32], index: 4, kind: input, shape index: {}]
  %s5 = inlined_call_operand.vmem [shape: bf16[32,32], index: 5, kind: input, shape index: {}]
  %s6 = inlined_call_operand.vmem [shape: f32[1,32], index: 6, kind: input, shape index: {}]
  %s7 = inlined_call_operand.vmem [shape: f32[1,32], index: 7, kind: input, shape index: {}]
  %s8 = inlined_call_operand.<no memory space> [shape: f32[1,1], index: 8, kind: input, shape index: {}]
  %s9 = inlined_call_operand.vmem [shape: f32[2,1], index: 9, kind: output, shape index: {}]
  %s10 = sld [smem:[#allocation0]]
  $region76: #{_forward_prepared.1} parent=0
    _
  %s12 = ssub.s32 1, %s10
  %s13 = scalar_select 0, %s12, %s10
  %v14 = vstv %s8
  %15 = vst [vmem:[#allocation2] sm:$0x1] %v14
  $region1: #{_forward_prepared.1} parent=0
    #allocation3 [shape = 'u8[4096]{0}', space=vmem, size = 0x1000, scoped, tag = 'output window, operand 0, single buffered']
    // Predicated region
    $region2: #{_forward_prepared.1} parent=1 // pred_check
      _
    $region3: #{_forward_prepared.1} parent=1 // pred_check_branch
      %17 = sbr.rel (0) target = $region5
    $region4: #{_forward_prepared.1} parent=1 // pred_region
      _
    $region5: #{_forward_prepared.1} parent=1 // pred_fallthru
      _
    // Predicated region
    $region6: #{_forward_prepared.1} parent=1 // pred_check
      _
    $region7: #{_forward_prepared.1} parent=1 // pred_check_branch
      %19 = sbr.rel (0) target = $region9
    $region8: #{_forward_prepared.1} parent=1 // pred_region
      _
    $region9: #{_forward_prepared.1} parent=1 // pred_fallthru
      _
    // Predicated region
    $region10: #{_forward_prepared.1} parent=1 // pred_check
      _
    $region11: #{_forward_prepared.1} parent=1 // pred_check_branch
      %21 = sbr.rel (0) target = $region13
    $region12: #{_forward_prepared.1} parent=1 // pred_region
      _
    $region13: #{_forward_prepared.1} parent=1 // pred_fallthru
      _
    // Predicated region
    $region14: #{_forward_prepared.1} parent=1 // pred_check
      _
    $region15: #{_forward_prepared.1} parent=1 // pred_check_branch
      %23 = sbr.rel (0) target = $region17
    $region16: #{_forward_prepared.1} parent=1 // pred_region
      _
    $region17: #{_forward_prepared.1} parent=1 // pred_fallthru
      _
    // Predicated region
    $region18: #{_forward_prepared.1} parent=1 // pred_check
      _
    $region19: #{_forward_prepared.1} parent=1 // pred_check_branch
      %25 = sbr.rel (0) target = $region21
    $region20: #{_forward_prepared.1} parent=1 // pred_region
      _
    $region21: #{_forward_prepared.1} parent=1 // pred_fallthru
      _
    // Predicated region
    $region22: #{_forward_prepared.1} parent=1 // pred_check
      _
    $region23: #{_forward_prepared.1} parent=1 // pred_check_branch
      %27 = sbr.rel (0) target = $region25
    $region24: #{_forward_prepared.1} parent=1 // pred_region
      _
    $region25: #{_forward_prepared.1} parent=1 // pred_fallthru
      _
    // Predicated region
    $region26: #{_forward_prepared.1} parent=1 // pred_check
      _
    $region27: #{_forward_prepared.1} parent=1 // pred_check_branch
      %29 = sbr.rel (0) target = $region29
    $region28: #{_forward_prepared.1} parent=1 // pred_region
      _
    $region29: #{_forward_prepared.1} parent=1 // pred_fallthru
      _
    // Predicated region
    $region30: #{_forward_prepared.1} parent=1 // pred_check
      _
    $region31: #{_forward_prepared.1} parent=1 // pred_check_branch
      %31 = sbr.rel (0) target = $region33
    $region32: #{_forward_prepared.1} parent=1 // pred_region
      _
    $region33: #{_forward_prepared.1} parent=1 // pred_fallthru
      _
    // Predicated region
    $region34: #{_forward_prepared.1} parent=1 // pred_check
      _
    $region35: #{_forward_prepared.1} parent=1 // pred_check_branch
      %33 = sbr.rel (0) target = $region37
    $region36: #{_forward_prepared.1} parent=1 // pred_region
      _
    $region37: #{_forward_prepared.1} parent=1 // pred_fallthru
      _
    %v35 = vld [vmem:[%s0] sm:$0xff]
    %v36 = vpack.c.bf16 %v35, %v35
    %v37 = vld [vmem:[%s1] sm:$0xff]
    %v38 = vld [vmem:[%s1 + $0x8] sm:$0xf]
    %v39 = vld [vmem:[%s1 + $0xc] sm:$0xff]
    %v40 = vld [vmem:[%s1 + $0x14] sm:$0xf]
    %v41 = vld [vmem:[%s1 + $0x18] sm:$0xff]
    %v42 = vld [vmem:[%s1 + $0x20] sm:$0xf]
    %v43 = vld [vmem:[%s1 + $0x24] sm:$0x11]
    %v44 = vld [vmem:[%s1 + $0x2c] sm:$0x1]
    %v45 = vld [vmem:[%s2] sm:$0x7]
    %v47 = vlaneseq
    %v48 = vshrl.u32 %v47, 7
    %v49 = vsub.s32 0, %v48
    %v50 = vrot.slane %v45, %v49
    %v51 = vlaneseq
    %v52 = vshrl.u32 %v51, 7
    %v53 = vsub.s32 1, %v52
    %v54 = vrot.slane %v45, %v53
    %v55 = vlaneseq
    %v56 = vshrl.u32 %v55, 7
    %v57 = vsub.s32 2, %v56
    %v58 = vrot.slane %v45, %v57
    %v70 = vunpack.c.l.b16 %v37
    %v71 = vunpack.c.h.b16 %v37
    %v72 = vunpack.c.l.b16 %v38
    %v73 = vunpack.c.l.b16 %v39
    %v74 = vunpack.c.h.b16 %v39
    %v75 = vunpack.c.l.b16 %v40
    %v76 = vunpack.c.l.b16 %v41
    %v77 = vunpack.c.h.b16 %v41
    %v78 = vunpack.c.l.b16 %v42
    %v79 = vunpack.c.l.b16 %v43
    %v80 = vunpack.c.h.b16 %v43
    %v81 = vunpack.c.l.b16 %v44
    %v82 = vpack.c.b16 %v73, %v70
    %v83 = vpack.c.b16 %v74, %v71
    %v84 = vpack.c.b16 %v75, %v72
    %v85 = vpack.c.b16 %v79, %v76
    %v86 = vpack.c.b16 %v80, %v77
    %v87 = vpack.c.b16 %v81, %v78
    %vm91 = vcmask 203776
    %v93 = vsel %vm91, %v36, 0
    %vm95 = vcmask 1043456
    %vm96 = vcmask 1044480
    %v97 = vsel %vm95, 4294967295, 65535
    %v98 = vsel %vm96, %v97, 0
    %v100 = vand.u32 %v85, %v98
    %v103 = vand.u32 %v86, %v98
    %v106 = vand.u32 %v87, %v98
    %108 = vmatprep.subr.bf16.mxu0 %v83
    %109 = vmatpush1.bf16.msra.mxu0 %v82
    %110 = vmatprep.subr.bf16.mxu0 %v103
    %111 = vmatpush1.bf16.msra.mxu0 %v100
    %112 = vmatprep.subr.bf16.mxu0 0
    %113 = vmatpush1.bf16.msra.mxu0 0
    %114 = vmatprep.subr.bf16.mxu0 0
    %115 = vmatpush1.bf16.msra.mxu0 0
    %116 = vmatprep.subr.bf16.mxu0 0
    %117 = vmatpush1.bf16.msra.mxu0 0
    %118 = vmatprep.subr.bf16.mxu0 0
    %119 = vmatpush1.bf16.msra.mxu0 0
    %120 = vmatprep.subr.bf16.mxu0 0
    %121 = vmatpush1.bf16.msra.mxu0 0
    %122 = vmatprep.subr.bf16.mxu0 0
    %123 = vmatpush1.bf16.msra.mxu0 0
    %124 = vmatprep.subr.bf16.mxu0 0
    %125 = vmatpush1.bf16.msra.mxu0 0
    %126 = vmatprep.subr.bf16.mxu0 0
    %127 = vmatpush1.bf16.msra.mxu0 0
    %128 = vmatprep.subr.bf16.mxu0 0
    %129 = vmatpush1.bf16.msra.mxu0 0
    %130 = vmatprep.subr.bf16.mxu0 0
    %131 = vmatpush1.bf16.msra.mxu0 0
    %132 = vmatprep.subr.bf16.mxu0 0
    %133 = vmatpush1.bf16.msra.mxu0 0
    %134 = vmatprep.subr.bf16.mxu0 0
    %135 = vmatpush1.bf16.msra.mxu0 0
    %136 = vmatprep.subr.bf16.mxu0 0
    %137 = vmatpush1.bf16.msra.mxu0 0
    %138 = vmatprep.subr.bf16.mxu0 0
    %139 = vmatpush1.bf16.msra.mxu0 0
    %140 = vmatprep.mubr.bf16.mxu0 0
    %141 = vmatmul.mubr.bf16.gmra.mrb[0].mxu0 %v93
    %v142 = vpop.f32.mrb[0].mxu0
    %v143 = vadd.f32 %v50, %v142
    %v144 = vpop.f32.mrb[0].mxu0
    %v145 = vadd.f32 %v54, %v144
    %v146 = vpop.f32.mrb[0].mxu0
    %v147 = vpop.f32.mrb[0].mxu0
    %148 = vdwg.mxu0
    %149 = vmatprep.subr.bf16.mxu0 0
    %150 = vmatpush1.bf16.msra.mxu0 %v84
    %151 = vmatprep.subr.bf16.mxu0 0
    %152 = vmatpush1.bf16.msra.mxu0 %v106
    %153 = vmatprep.subr.bf16.mxu0 0
    %154 = vmatpush1.bf16.msra.mxu0 0
    %155 = vmatprep.subr.bf16.mxu0 0
    %156 = vmatpush1.bf16.msra.mxu0 0
    %157 = vmatprep.subr.bf16.mxu0 0
    %158 = vmatpush1.bf16.msra.mxu0 0
    %159 = vmatprep.subr.bf16.mxu0 0
    %160 = vmatpush1.bf16.msra.mxu0 0
    %161 = vmatprep.subr.bf16.mxu0 0
    %162 = vmatpush1.bf16.msra.mxu0 0
    %163 = vmatprep.subr.bf16.mxu0 0
    %164 = vmatpush1.bf16.msra.mxu0 0
    %165 = vmatprep.subr.bf16.mxu0 0
    %166 = vmatpush1.bf16.msra.mxu0 0
    %167 = vmatprep.subr.bf16.mxu0 0
    %168 = vmatpush1.bf16.msra.mxu0 0
    %169 = vmatprep.subr.bf16.mxu0 0
    %170 = vmatpush1.bf16.msra.mxu0 0
    %171 = vmatprep.subr.bf16.mxu0 0
    %172 = vmatpush1.bf16.msra.mxu0 0
    %173 = vmatprep.subr.bf16.mxu0 0
    %174 = vmatpush1.bf16.msra.mxu0 0
    %175 = vmatprep.subr.bf16.mxu0 0
    %176 = vmatpush1.bf16.msra.mxu0 0
    %177 = vmatprep.subr.bf16.mxu0 0
    %178 = vmatpush1.bf16.msra.mxu0 0
    %179 = vmatprep.subr.bf16.mxu0 0
    %180 = vmatpush1.bf16.msra.mxu0 0
    %181 = vmatprep.mubr.bf16.mxu0 0
    %182 = vmatmul.mubr.bf16.gmra.mrb[0].mxu0 %v93
    %v183 = vpop.f32.mrb[0].mxu0
    %v184 = vadd.f32 %v58, %v183
    %v185 = vpop.f32.mrb[0].mxu0
    %v186 = vpop.f32.mrb[0].mxu0
    %v187 = vpop.f32.mrb[0].mxu0
    %188 = vdwg.mxu0
    %vm189 = vcmp.gt.f32.partialorder %v143, 0.0
    %vm190 = vcmp.gt.f32.partialorder %v145, 0.0
    %vm191 = vcmp.gt.f32.partialorder %v184, 0.0
    %v192 = vmin.f32 %v143, 0.0
    %v193 = vmin.f32 %v145, 0.0
    %v194 = vmin.f32 %v184, 0.0
    %v195 = vmul.f32 %v192, 1.442695
    %v196 = vpow.pop %v195
    %v197 = vmul.f32 %v193, 1.442695
    %v198 = vpow.pop %v197
    %v199 = vmul.f32 %v194, 1.442695
    %v200 = vpow.pop %v199
    %v201 = vsub.f32 %v196, 1.0
    %v202 = vsub.f32 %v198, 1.0
    %v203 = vsub.f32 %v200, 1.0
    %v204 = vsel %vm189, %v143, %v201
    %v205 = vsel %vm190, %v145, %v202
    %v206 = vsel %vm191, %v184, %v203
    %v207 = vpack.c.bf16 %v204, %v204
    %v208 = vpack.c.bf16 %v205, %v205
    %v209 = vpack.c.bf16 %v206, %v206
    %v210 = vld [vmem:[%s3] sm:$0xf]
    %v211 = vld [vmem:[%s3 + $0x4] sm:$0xf]
    %v212 = vld [vmem:[%s3 + $0x8] sm:$0xf]
    %v213 = vld [vmem:[%s3 + $0xc] sm:$0xf]
    %v214 = vld [vmem:[%s3 + $0x10] sm:$0xf]
    %v215 = vld [vmem:[%s3 + $0x14] sm:$0xf]
    %v216 = vld [vmem:[%s3 + $0x18] sm:$0xf]
    %v217 = vld [vmem:[%s3 + $0x1c] sm:$0xf]
    %v218 = vld [vmem:[%s3 + $0x20] sm:$0xf]
    %v219 = vld [vmem:[%s3 + $0x24] sm:$0xf]
    %v220 = vld [vmem:[%s3 + $0x28] sm:$0xf]
    %v221 = vld [vmem:[%s3 + $0x2c] sm:$0xf]
    %v222 = vld [vmem:[%s3 + $0x30] sm:$0xf]
    %v223 = vld [vmem:[%s3 + $0x34] sm:$0xf]
    %v224 = vld [vmem:[%s3 + $0x38] sm:$0xf]
    %v225 = vld [vmem:[%s3 + $0x3c] sm:$0xf]
    %v226 = vld [vmem:[%s3 + $0x40] sm:$0xf]
    %v227 = vld [vmem:[%s3 + $0x44] sm:$0xf]
    %v228 = vld [vmem:[%s3 + $0x48] sm:$0xf]
    %v229 = vld [vmem:[%s3 + $0x4c] sm:$0xf]
    %v230 = vld [vmem:[%s3 + $0x50] sm:$0xf]
    %v231 = vld [vmem:[%s3 + $0x54] sm:$0xf]
    %v232 = vld [vmem:[%s3 + $0x58] sm:$0xf]
    %v233 = vld [vmem:[%s3 + $0x5c] sm:$0xf]
    %v234 = vld [vmem:[%s3 + $0x60] sm:$0xf]
    %v235 = vld [vmem:[%s3 + $0x64] sm:$0xf]
    %v236 = vld [vmem:[%s3 + $0x68] sm:$0xf]
    %v237 = vld [vmem:[%s3 + $0x6c] sm:$0xf]
    %v238 = vld [vmem:[%s3 + $0x70] sm:$0xf]
    %v239 = vld [vmem:[%s3 + $0x74] sm:$0xf]
    %v240 = vld [vmem:[%s3 + $0x78] sm:$0xf]
    %v241 = vld [vmem:[%s3 + $0x7c] sm:$0xf]
    %v242 = vld [vmem:[%s3 + $0x80] sm:$0xf]
    %v243 = vld [vmem:[%s3 + $0x84] sm:$0xf]
    %v244 = vld [vmem:[%s3 + $0x88] sm:$0xf]
    %v245 = vld [vmem:[%s3 + $0x8c] sm:$0xf]
    %v246 = vld [vmem:[%s3 + $0x90] sm:$0xf]
    %v247 = vld [vmem:[%s3 + $0x94] sm:$0xf]
    %v248 = vld [vmem:[%s3 + $0x98] sm:$0xf]
    %v249 = vld [vmem:[%s3 + $0x9c] sm:$0xf]
    %v250 = vld [vmem:[%s3 + $0xa0] sm:$0xf]
    %v251 = vld [vmem:[%s3 + $0xa4] sm:$0xf]
    %v252 = vld [vmem:[%s3 + $0xa8] sm:$0xf]
    %v253 = vld [vmem:[%s3 + $0xac] sm:$0xf]
    %v254 = vld [vmem:[%s3 + $0xb0] sm:$0xf]
    %v255 = vld [vmem:[%s3 + $0xb4] sm:$0xf]
    %v256 = vld [vmem:[%s3 + $0xb8] sm:$0xf]
    %v257 = vld [vmem:[%s3 + $0xbc] sm:$0xf]
    %v258 = vld [vmem:[%s4] sm:$0x1]
    %v260 = vlaneseq
    %v261 = vshrl.u32 %v260, 7
    %v262 = vsub.s32 0, %v261
    %v263 = vrot.slane %v258, %v262
    %v313 = vunpack.c.l.b16 %v210
    %v314 = vunpack.c.l.b16 %v211
    %v315 = vunpack.c.l.b16 %v212
    %v316 = vunpack.c.l.b16 %v213
    %v317 = vunpack.c.l.b16 %v214
    %v318 = vunpack.c.l.b16 %v215
    %v319 = vunpack.c.l.b16 %v216
    %v320 = vunpack.c.l.b16 %v217
    %v321 = vunpack.c.l.b16 %v218
    %v322 = vunpack.c.l.b16 %v219
    %v323 = vunpack.c.l.b16 %v220
    %v324 = vunpack.c.l.b16 %v221
    %v325 = vunpack.c.l.b16 %v222
    %v326 = vunpack.c.l.b16 %v223
    %v327 = vunpack.c.l.b16 %v224
    %v328 = vunpack.c.l.b16 %v225
    %v329 = vunpack.c.l.b16 %v226
    %v330 = vunpack.c.l.b16 %v227
    %v331 = vunpack.c.l.b16 %v228
    %v332 = vunpack.c.l.b16 %v229
    %v333 = vunpack.c.l.b16 %v230
    %v334 = vunpack.c.l.b16 %v231
    %v335 = vunpack.c.l.b16 %v232
    %v336 = vunpack.c.l.b16 %v233
    %v337 = vunpack.c.l.b16 %v234
    %v338 = vunpack.c.l.b16 %v235
    %v339 = vunpack.c.l.b16 %v236
    %v340 = vunpack.c.l.b16 %v237
    %v341 = vunpack.c.l.b16 %v238
    %v342 = vunpack.c.l.b16 %v239
    %v343 = vunpack.c.l.b16 %v240
    %v344 = vunpack.c.l.b16 %v241
    %v345 = vunpack.c.l.b16 %v242
    %v346 = vunpack.c.l.b16 %v243
    %v347 = vunpack.c.l.b16 %v244
    %v348 = vunpack.c.l.b16 %v245
    %v349 = vunpack.c.l.b16 %v246
    %v350 = vunpack.c.l.b16 %v247
    %v351 = vunpack.c.l.b16 %v248
    %v352 = vunpack.c.l.b16 %v249
    %v353 = vunpack.c.l.b16 %v250
    %v354 = vunpack.c.l.b16 %v251
    %v355 = vunpack.c.l.b16 %v252
    %v356 = vunpack.c.l.b16 %v253
    %v357 = vunpack.c.l.b16 %v254
    %v358 = vunpack.c.l.b16 %v255
    %v359 = vunpack.c.l.b16 %v256
    %v360 = vunpack.c.l.b16 %v257
    %v361 = vpack.c.b16 %v314, %v313
    %v362 = vpack.c.b16 %v316, %v315
    %v363 = vpack.c.b16 %v318, %v317
    %v364 = vpack.c.b16 %v320, %v319
    %v365 = vpack.c.b16 %v322, %v321
    %v366 = vpack.c.b16 %v324, %v323
    %v367 = vpack.c.b16 %v326, %v325
    %v368 = vpack.c.b16 %v328, %v327
    %v369 = vpack.c.b16 %v330, %v329
    %v370 = vpack.c.b16 %v332, %v331
    %v371 = vpack.c.b16 %v334, %v333
    %v372 = vpack.c.b16 %v336, %v335
    %v373 = vpack.c.b16 %v338, %v337
    %v374 = vpack.c.b16 %v340, %v339
    %v375 = vpack.c.b16 %v342, %v341
    %v376 = vpack.c.b16 %v344, %v343
    %v377 = vpack.c.b16 %v346, %v345
    %v378 = vpack.c.b16 %v348, %v347
    %v379 = vpack.c.b16 %v350, %v349
    %v380 = vpack.c.b16 %v352, %v351
    %v381 = vpack.c.b16 %v354, %v353
    %v382 = vpack.c.b16 %v356, %v355
    %v383 = vpack.c.b16 %v358, %v357
    %v384 = vpack.c.b16 %v360, %v359
    %409 = vmatprep.subr.bf16.mxu0 0
    %410 = vmatpush1.bf16.msra.mxu0 %v361
    %411 = vmatprep.subr.bf16.mxu0 0
    %412 = vmatpush1.bf16.msra.mxu0 %v362
    %413 = vmatprep.subr.bf16.mxu0 0
    %414 = vmatpush1.bf16.msra.mxu0 %v363
    %415 = vmatprep.subr.bf16.mxu0 0
    %416 = vmatpush1.bf16.msra.mxu0 %v364
    %417 = vmatprep.subr.bf16.mxu0 0
    %418 = vmatpush1.bf16.msra.mxu0 %v365
    %419 = vmatprep.subr.bf16.mxu0 0
    %420 = vmatpush1.bf16.msra.mxu0 %v366
    %421 = vmatprep.subr.bf16.mxu0 0
    %422 = vmatpush1.bf16.msra.mxu0 %v367
    %423 = vmatprep.subr.bf16.mxu0 0
    %424 = vmatpush1.bf16.msra.mxu0 %v368
    %425 = vmatprep.subr.bf16.mxu0 0
    %426 = vmatpush1.bf16.msra.mxu0 %v369
    %427 = vmatprep.subr.bf16.mxu0 0
    %428 = vmatpush1.bf16.msra.mxu0 %v370
    %429 = vmatprep.subr.bf16.mxu0 0
    %430 = vmatpush1.bf16.msra.mxu0 %v371
    %431 = vmatprep.subr.bf16.mxu0 0
    %432 = vmatpush1.bf16.msra.mxu0 %v372
    %433 = vmatprep.subr.bf16.mxu0 0
    %434 = vmatpush1.bf16.msra.mxu0 %v373
    %435 = vmatprep.subr.bf16.mxu0 0
    %436 = vmatpush1.bf16.msra.mxu0 %v374
    %437 = vmatprep.subr.bf16.mxu0 0
    %438 = vmatpush1.bf16.msra.mxu0 %v375
    %439 = vmatprep.subr.bf16.mxu0 0
    %440 = vmatpush1.bf16.msra.mxu0 %v376
    %441 = vmatprep.mubr.bf16.mxu0 %v208
    %442 = vmatmul.mubr.bf16.gmra.mrb[0].mxu0 %v207
    %v443 = vpop.f32.mrb[0].mxu0
    %v444 = vadd.f32 %v263, %v443
    %v445 = vpop.f32.mrb[0].mxu0
    %v446 = vpop.f32.mrb[0].mxu0
    %v447 = vpop.f32.mrb[0].mxu0
    %448 = vdwg.mxu0
    %449 = vmatprep.subr.bf16.mxu0 0
    %450 = vmatpush1.bf16.msra.mxu0 %v377
    %451 = vmatprep.subr.bf16.mxu0 0
    %452 = vmatpush1.bf16.msra.mxu0 %v378
    %453 = vmatprep.subr.bf16.mxu0 0
    %454 = vmatpush1.bf16.msra.mxu0 %v379
    %455 = vmatprep.subr.bf16.mxu0 0
    %456 = vmatpush1.bf16.msra.mxu0 %v380
    %457 = vmatprep.subr.bf16.mxu0 0
    %458 = vmatpush1.bf16.msra.mxu0 %v381
    %459 = vmatprep.subr.bf16.mxu0 0
    %460 = vmatpush1.bf16.msra.mxu0 %v382
    %461 = vmatprep.subr.bf16.mxu0 0
    %462 = vmatpush1.bf16.msra.mxu0 %v383
    %463 = vmatprep.subr.bf16.mxu0 0
    %464 = vmatpush1.bf16.msra.mxu0 %v384
    %465 = vmatprep.subr.bf16.mxu0 0
    %466 = vmatpush1.bf16.msra.mxu0 0
    %467 = vmatprep.subr.bf16.mxu0 0
    %468 = vmatpush1.bf16.msra.mxu0 0
    %469 = vmatprep.subr.bf16.mxu0 0
    %470 = vmatpush1.bf16.msra.mxu0 0
    %471 = vmatprep.subr.bf16.mxu0 0
    %472 = vmatpush1.bf16.msra.mxu0 0
    %473 = vmatprep.subr.bf16.mxu0 0
    %474 = vmatpush1.bf16.msra.mxu0 0
    %475 = vmatprep.subr.bf16.mxu0 0
    %476 = vmatpush1.bf16.msra.mxu0 0
    %477 = vmatprep.subr.bf16.mxu0 0
    %478 = vmatpush1.bf16.msra.mxu0 0
    %479 = vmatprep.subr.bf16.mxu0 0
    %480 = vmatpush1.bf16.msra.mxu0 0
    %481 = vmatprep.mubr.bf16.mxu0 0
    %482 = vmatmul.mubr.bf16.gmra.mrb[0].mxu0 %v209
    %v483 = vpop.f32.mrb[0].mxu0
    %v484 = vadd.f32 %v444, %v483
    %v485 = vpop.f32.mrb[0].mxu0
    %v486 = vpop.f32.mrb[0].mxu0
    %v487 = vpop.f32.mrb[0].mxu0
    %488 = vdwg.mxu0
    %vm489 = vcmp.gt.f32.partialorder %v484, 0.0
    %v490 = vmin.f32 %v484, 0.0
    %v491 = vmul.f32 %v490, 1.442695
    %v492 = vpow.pop %v491
    %v493 = vsub.f32 %v492, 1.0
    %v494 = vsel %vm489, %v484, %v493
    %v495 = vpack.c.bf16 %v494, %v494
    %v496 = vld [vmem:[%s5] sm:$0xf]
    %v497 = vld [vmem:[%s5 + $0x4] sm:$0xf]
    %v498 = vld [vmem:[%s5 + $0x8] sm:$0xf]
    %v499 = vld [vmem:[%s5 + $0xc] sm:$0xf]
    %v500 = vld [vmem:[%s6] sm:$0x1]
    %v502 = vlaneseq
    %v503 = vshrl.u32 %v502, 7
    %v504 = vsub.s32 0, %v503
    %v505 = vrot.slane %v500, %v504
    %v511 = vunpack.c.l.b16 %v496
    %v512 = vunpack.c.l.b16 %v497
    %v513 = vunpack.c.l.b16 %v498
    %v514 = vunpack.c.l.b16 %v499
    %v515 = vpack.c.b16 %v512, %v511
    %v516 = vpack.c.b16 %v514, %v513
    %vm519 = vcmask 261120
    %v521 = vsel %vm519, %v495, 0
    %523 = vmatprep.subr.bf16.mxu0 0
    %524 = vmatpush1.bf16.msra.mxu0 %v515
    %525 = vmatprep.subr.bf16.mxu0 0
    %526 = vmatpush1.bf16.msra.mxu0 %v516
    %527 = vmatprep.subr.bf16.mxu0 0
    %528 = vmatpush1.bf16.msra.mxu0 0
    %529 = vmatprep.subr.bf16.mxu0 0
    %530 = vmatpush1.bf16.msra.mxu0 0
    %531 = vmatprep.subr.bf16.mxu0 0
    %532 = vmatpush1.bf16.msra.mxu0 0
    %533 = vmatprep.subr.bf16.mxu0 0
    %534 = vmatpush1.bf16.msra.mxu0 0
    %535 = vmatprep.subr.bf16.mxu0 0
    %536 = vmatpush1.bf16.msra.mxu0 0
    %537 = vmatprep.subr.bf16.mxu0 0
    %538 = vmatpush1.bf16.msra.mxu0 0
    %539 = vmatprep.subr.bf16.mxu0 0
    %540 = vmatpush1.bf16.msra.mxu0 0
    %541 = vmatprep.subr.bf16.mxu0 0
    %542 = vmatpush1.bf16.msra.mxu0 0
    %543 = vmatprep.subr.bf16.mxu0 0
    %544 = vmatpush1.bf16.msra.mxu0 0
    %545 = vmatprep.subr.bf16.mxu0 0
    %546 = vmatpush1.bf16.msra.mxu0 0
    %547 = vmatprep.subr.bf16.mxu0 0
    %548 = vmatpush1.bf16.msra.mxu0 0
    %549 = vmatprep.subr.bf16.mxu0 0
    %550 = vmatpush1.bf16.msra.mxu0 0
    %551 = vmatprep.subr.bf16.mxu0 0
    %552 = vmatpush1.bf16.msra.mxu0 0
    %553 = vmatprep.subr.bf16.mxu0 0
    %554 = vmatpush1.bf16.msra.mxu0 0
    %555 = vmatprep.mubr.bf16.mxu0 0
    %556 = vmatmul.mubr.bf16.gmra.mrb[0].mxu0 %v521
    %v557 = vpop.f32.mrb[0].mxu0
    %v558 = vadd.f32 %v505, %v557
    %v559 = vpop.f32.mrb[0].mxu0
    %v560 = vpop.f32.mrb[0].mxu0
    %v561 = vpop.f32.mrb[0].mxu0
    %562 = vdwg.mxu0
    %vm563 = vcmp.gt.f32.partialorder %v558, 0.0
    %v564 = vmin.f32 %v558, 0.0
    %v565 = vmul.f32 %v564, 1.442695
    %v566 = vpow.pop %v565
    %v567 = vsub.f32 %v566, 1.0
    %v568 = vsel %vm563, %v558, %v567
    %v569 = vld [vmem:[%s7] sm:$0x1]
    %v571 = vlaneseq
    %v572 = vshrl.u32 %v571, 7
    %v573 = vsub.s32 0, %v572
    %v574 = vrot.slane %v569, %v573
    %v576 = vmul.f32 %v568, %v574
    %v577 = vsel %vm519, %v576, 0.0
    %578 = vadd.xlane.f32.xlu0 %v577
    %v579 = vpop.xlane.xlu0 %578
    %v580 = vld [vmem:[#allocation2] sm:$0x1]
    %v582 = vlaneseq
    %v583 = vshrl.u32 %v582, 7
    %v584 = vsub.s32 0, %v583
    %v585 = vrot.slane %v580, %v584
    %v587 = vadd.f32 %v579, %v585
    %vm588 = vcmask 7168
    %589 = vst.msk [vmem:[#allocation3] sm:$0xff] %vm588, %v587
    // Predicated region
    $region38: #{_forward_prepared.1} parent=1 // pred_check
      _
    $region39: #{_forward_prepared.1} parent=1 // pred_check_branch
      %591 = sbr.rel (0) target = $region41
    $region40: #{_forward_prepared.1} parent=1 // pred_region
      // Predicated region
      $region42: #{_forward_prepared.1} parent=40 // pred_check
        _
      $region43: #{_forward_prepared.1} parent=40 // pred_check_branch
        %593 = sbr.rel (0) target = $region45
      $region44: #{_forward_prepared.1} parent=40 // pred_region
        // Predicated region
        $region46: #{_forward_prepared.1} parent=44 // pred_check
          _
        $region47: #{_forward_prepared.1} parent=44 // pred_check_branch
          %595 = sbr.rel target = $region49
        $region48: #{_forward_prepared.1} parent=44 // pred_region
          // Predicated region
          $region61: #{_forward_prepared.1} parent=48 // pred_check
            _
          $region62: #{_forward_prepared.1} parent=48 // pred_check_branch
            %610 = sbr.rel (0) target = $region64
          $region63: #{_forward_prepared.1} parent=48 // pred_region
            loop: start=0, step=1, limit=1
            $region65: #{_forward_prepared.1} parent=63 // loop_pre_header
              _
            $region66: #{_forward_prepared.1} parent=63 // loop_header
              %s613 = sphi 0, %s617
              %p614 = scmp.ge.s32.totalorder %s613, 1
              %s618 = sphi [#allocation3], [#allocation3]
              %s619 = sphi %s9, %s9
            $region67: #{_forward_prepared.1} parent=63 // loop_header_branch
              %616 = sbr.rel (%p614) target = $region71
            $region68: #{_forward_prepared.1} parent=63 // loop_body
              %v620 = vld [vmem:[%s618] sm:$0x3]
              %621 = vst [vmem:[%s619] sm:$0x3] %v620
            $region69: #{_forward_prepared.1} parent=63 // loop_footer
              %s617 = sadd.s32 1, %s613
            $region70: #{_forward_prepared.1} parent=63 // loop_footer_branch
              %612 = sbr.rel target = $region66
            $region71: #{_forward_prepared.1} parent=63 // loop_exit
              _
          $region64: #{_forward_prepared.1} parent=48 // pred_fallthru
            _
        $region49: #{_forward_prepared.1} parent=44 // pred_fallthru
          _
        // Predicated region
        $region50: #{_forward_prepared.1} parent=44 // pred_check
          _
        $region51: #{_forward_prepared.1} parent=44 // pred_check_branch
          %597 = sbr.rel (0) target = $region53
        $region52: #{_forward_prepared.1} parent=44 // pred_region
          loop: start=0, step=1, limit=1
          $region54: #{_forward_prepared.1} parent=52 // loop_pre_header
            _
          $region55: #{_forward_prepared.1} parent=52 // loop_header
            %s600 = sphi 0, %s604
            %p601 = scmp.ge.s32.totalorder %s600, 1
            %s605 = sphi [#allocation3], [#allocation3]
            %s606 = sphi %s9, %s9
          $region56: #{_forward_prepared.1} parent=52 // loop_header_branch
            %603 = sbr.rel (%p601) target = $region60
          $region57: #{_forward_prepared.1} parent=52 // loop_body
            %v607 = vld [vmem:[%s605] sm:$0x3]
            %608 = vst [vmem:[%s606] sm:$0x3] %v607
          $region58: #{_forward_prepared.1} parent=52 // loop_footer
            %s604 = sadd.s32 1, %s600
          $region59: #{_forward_prepared.1} parent=52 // loop_footer_branch
            %599 = sbr.rel target = $region55
          $region60: #{_forward_prepared.1} parent=52 // loop_exit
            _
        $region53: #{_forward_prepared.1} parent=44 // pred_fallthru
          _
      $region45: #{_forward_prepared.1} parent=40 // pred_fallthru
        _
      %622 = vnop
    $region41: #{_forward_prepared.1} parent=1 // pred_fallthru
      _
    // Predicated region
    $region72: #{_forward_prepared.1} parent=1 // pred_check
      _
    $region73: #{_forward_prepared.1} parent=1 // pred_check_branch
      %624 = sbr.rel (0) target = $region75
    $region74: #{_forward_prepared.1} parent=1 // pred_region
      _
    $region75: #{_forward_prepared.1} parent=1 // pred_fallthru
      _

</llo_original>
